<compile_context>
chip_gen: v7x
topology: tpu7x:2x2x1
jax: 0.10.0
libtpu: 0.0.40
codegen_flags: <defaults>
</compile_context>

<pallas_src>
import jax
import jax.numpy as jnp
from jax import lax
from jax.experimental import pallas as pl
from jax.experimental.pallas import tpu as pltpu


def _pick_tb(B, d_in, d_out, budget_bytes=8 << 20):
    """Largest batch tile (multiple of 8 dividing B) whose double-buffered dyn_w
    block stays within a conservative VMEM budget (safe for v7x's 64 MiB)."""
    per_sample_bytes = 4 * (d_out * d_in + d_out + d_in + d_out)
    for tb in (64, 32, 16, 8):
        if B % tb == 0 and 2 * tb * per_sample_bytes <= budget_bytes:
            return tb
    return B  # small / ragged batch: single grid step over the whole batch


def _hyper_linear_kernel(alpha_ref, x_ref, bw_ref, bb_ref, dw_ref, db_ref, o_ref):
    # alpha_ref: SMEM (1,)           scalar mixing coefficient
    # x_ref : (TB, d_in)             batch tile of activations
    # bw_ref: (d_out, d_in)          shared base weight (constant across grid)
    # bb_ref: (1, d_out)             shared base bias
    # dw_ref: (TB, d_out, d_in)      per-sample dynamic weights (dominant HBM stream)
    # db_ref: (TB, d_out)            per-sample dynamic biases
    alpha = alpha_ref[0]
    x = x_ref[...]                                               # (TB, d_in) f32

    # Shared-weight term: one dense MXU matmul over the whole batch tile.
    base = lax.dot_general(x, bw_ref[...], (((1,), (1,)), ((), ())),
                           preferred_element_type=jnp.float32)   # (TB, d_out)

    # Per-sample term: VPU broadcast-multiply + lane reduction over streamed dyn_w.
    dyn = jnp.sum(x[:, None, :] * dw_ref[...], axis=-1)          # (TB, d_out)

    bias = bb_ref[...] + alpha * db_ref[...]                     # (TB, d_out) via bcast
    o_ref[...] = (base + alpha * dyn + bias).astype(o_ref.dtype)


def _base_linear_kernel(x_ref, bw_ref, bb_ref, o_ref):
    y = lax.dot_general(x_ref[...], bw_ref[...], (((1,), (1,)), ((), ())),
                        preferred_element_type=jnp.float32)
    o_ref[...] = (y + bb_ref[...]).astype(o_ref.dtype)


def hyper_linear(x, base_w, base_b, dyn_w, dyn_b, alpha):
    """y[b] = x[b] @ (base_w + alpha*dyn_w[b]).T + (base_b + alpha*dyn_b[b]).

    Shapes: x (B, d_in), base_w (d_out, d_in), base_b (1, d_out),
            dyn_w (B, d_out, d_in), dyn_b (B, d_out), alpha (1,).
    """
    B, d_in = x.shape
    d_out = base_w.shape[0]
    tb = _pick_tb(B, d_in, d_out)
    grid = (B // tb,)

    flops = 4 * B * d_in * d_out                     # base matmul + dyn multiply-reduce
    bytes_accessed = (4 * B * d_out * d_in           # dyn_w stream (dominant)
                      + 4 * B * (d_in + 2 * d_out)   # x, dyn_b, output
                      + 4 * d_out * (d_in + 1))      # shared base weight/bias

    return pl.pallas_call(
        _hyper_linear_kernel,
        grid=grid,
        in_specs=[
            pl.BlockSpec(memory_space=pltpu.SMEM),                  # alpha (1,)
            pl.BlockSpec((tb, d_in), lambda i: (i, 0)),             # x batch tile
            pl.BlockSpec((d_out, d_in), lambda i: (0, 0)),          # base W (shared)
            pl.BlockSpec((1, d_out), lambda i: (0, 0)),             # base bias (shared)
            pl.BlockSpec((tb, d_out, d_in), lambda i: (i, 0, 0)),   # dynamic W
            pl.BlockSpec((tb, d_out), lambda i: (i, 0)),            # dynamic bias
        ],
        out_specs=pl.BlockSpec((tb, d_out), lambda i: (i, 0)),      # lane-dense 2-D out
        out_shape=jax.ShapeDtypeStruct((B, d_out), x.dtype),
        compiler_params=pltpu.CompilerParams(dimension_semantics=("parallel",)),
        cost_estimate=pl.CostEstimate(flops=flops, transcendentals=0,
                                      bytes_accessed=bytes_accessed),
    )(alpha, x, base_w, base_b, dyn_w, dyn_b)


def base_linear(x, base_w, base_b):
    """Base-only fast path (dynamic_weights is None): y = x @ base_w.T + base_b."""
    B, d_in = x.shape
    d_out = base_w.shape[0]
    tb = _pick_tb(B, d_in, d_out)
    return pl.pallas_call(
        _base_linear_kernel,
        grid=(B // tb,),
        in_specs=[
            pl.BlockSpec((tb, d_in), lambda i: (i, 0)),
            pl.BlockSpec((d_out, d_in), lambda i: (0, 0)),
            pl.BlockSpec((1, d_out), lambda i: (0, 0)),
        ],
        out_specs=pl.BlockSpec((tb, d_out), lambda i: (i, 0)),
        out_shape=jax.ShapeDtypeStruct((B, d_out), x.dtype),
        compiler_params=pltpu.CompilerParams(dimension_semantics=("parallel",)),
        cost_estimate=pl.CostEstimate(
            flops=2 * B * d_in * d_out, transcendentals=0,
            bytes_accessed=4 * (B * (d_in + d_out) + d_out * (d_in + 1))),
    )(x, base_w, base_b)


class HyperSequentialPallas:
    """JAX/Pallas port of HyperSequential over stacked HyperLinear layers."""

    def __init__(self, layer_dims, key, use_base_weights=True):
        self.layer_dims = list(layer_dims)              # [(d_in, d_out), ...]
        self.use_base_weights = use_base_weights
        self.total_weights = sum(di * do + do for di, do in self.layer_dims)
        if use_base_weights:
            # ini_weights_: deterministic per-layer kaiming-uniform-like init.
            chunks = []
            for di, do in self.layer_dims:
                key, kw, kb = jax.random.split(key, 3)
                bound = 1.0 / (di ** 0.5)
                w = jax.random.uniform(kw, (do * di,), minval=-bound, maxval=bound,
                                       dtype=jnp.float32)
                b = jax.random.uniform(kb, (do,), minval=-bound, maxval=bound,
                                       dtype=jnp.float32)
                chunks.append(jnp.concatenate([w, b]))
            self.base_weights = jnp.concatenate(chunks).reshape(1, self.total_weights)
            self.alpha = jnp.full((1,), 1e-16, dtype=jnp.float32)  # th.zeros(1)+1e-16

    def num_weights(self):
        return self.total_weights

    def __call__(self, x, dynamic_weights):
        if not self.use_base_weights and dynamic_weights is None:
            raise ValueError("dynamic_weights required when use_base_weights=False")
        B = x.shape[0]
        h = x
        offset = 0
        for di, do in self.layer_dims:
            nw = di * do + do
            if self.use_base_weights:
                base = self.base_weights[:, offset:offset + nw]
                bw = base[:, :di * do].reshape(do, di)
                bb = base[:, di * do:].reshape(1, do)
                alpha = self.alpha
            else:
                # layer sees the dynamic slice directly: base=0, alpha=1
                bw = jnp.zeros((do, di), dtype=jnp.float32)
                bb = jnp.zeros((1, do), dtype=jnp.float32)
                alpha = jnp.ones((1,), dtype=jnp.float32)

            if dynamic_weights is None:
                # Skip the dyn stream entirely (no zeros array through HBM).
                h = base_linear(h, bw, bb)
            else:
                dyn = dynamic_weights[:, offset:offset + nw]
                dw = dyn[:, :di * do].reshape(B, do, di)
                db = dyn[:, di * do:].reshape(B, do)
                h = hyper_linear(h, bw, bb, dw, db, alpha)
            offset += nw
        return h


def _reference(x, dyn, model):
    """Pure-JAX reference mirroring the PyTorch forward."""
    h = x
    offset = 0
    B = x.shape[0]
    for di, do in model.layer_dims:
        nw = di * do + do
        if model.use_base_weights:
            hw = jnp.broadcast_to(model.base_weights[:, offset:offset + nw], (B, nw))
            if dyn is not None:
                hw = hw + model.alpha * dyn[:, offset:offset + nw]
        else:
            hw = dyn[:, offset:offset + nw]
        W = hw[:, :di * do].reshape(B, do, di)
        b = hw[:, di * do:]
        h = jnp.einsum('bi,boi->bo', h, W) + b
        offset += nw
    return h


if __name__ == "__main__":
    key = jax.random.PRNGKey(0)
    k_init, k_x, k_dyn = jax.random.split(key, 3)

    # Two stacked HyperLinear layers: 32 -> 16 -> 8
    layer_dims = [(32, 16), (16, 8)]
    model = HyperSequentialPallas(layer_dims, k_init, use_base_weights=True)

    B, d_in = 2, 32
    x = jax.random.normal(k_x, (B, d_in), dtype=jnp.float32)
    dynamic_weights = jax.random.normal(k_dyn, (B, model.num_weights()),
                                        dtype=jnp.float32)

    # Main path: base + alpha * dynamic.
    out = jax.block_until_ready(model(x, dynamic_weights))
    ref = _reference(x, dynamic_weights, model)
    assert out.shape == (B, 8)
    assert jnp.allclose(out, ref, atol=1e-5, rtol=1e-5), "mismatch vs reference"

    # dynamic_weights is None path: base-only matmul, no dyn stream.
    out_none = jax.block_until_ready(model(x, None))
    ref_none = _reference(x, None, model)
    assert jnp.allclose(out_none, ref_none, atol=1e-5, rtol=1e-5), "mismatch (None path)"

    print("KERNEL_OK")
</pallas_src>

<mosaic_0001>
module attributes {stable_mosaic.version = 11 : i64} {
  func.func @_hyper_linear_kernel(%arg0: i32, %arg1: memref<1xf32, #tpu.memory_space<smem>>, %arg2: memref<2x32xf32, #tpu.memory_space<vmem>>, %arg3: memref<16x32xf32, #tpu.memory_space<vmem>>, %arg4: memref<1x16xf32, #tpu.memory_space<vmem>>, %arg5: memref<2x16x32xf32, #tpu.memory_space<vmem>>, %arg6: memref<2x16xf32, #tpu.memory_space<vmem>>, %arg7: memref<2x16xf32, #tpu.memory_space<vmem>>) attributes {dimension_semantics = [#tpu.dimension_semantics<parallel>], iteration_bounds = array<i64: 1>, scalar_prefetch = 0 : i64, scratch_operands = 0 : i64, tpu.core_type = #tpu.core_type<tc>, window_params = [{transform_indices = @transform_0, window_bounds = array<i64: 1>}, {transform_indices = @transform_1, window_bounds = array<i64: 2, 32>}, {pipeline_mode = #tpu.pipeline_mode<synchronous>, transform_indices = @transform_2, window_bounds = array<i64: 16, 32>}, {pipeline_mode = #tpu.pipeline_mode<synchronous>, transform_indices = @transform_3, window_bounds = array<i64: 1, 16>}, {transform_indices = @transform_4, window_bounds = array<i64: 2, 16, 32>}, {transform_indices = @transform_5, window_bounds = array<i64: 2, 16>}, {transform_indices = @transform_6, window_bounds = array<i64: 2, 16>}]} {
    %c0 = arith.constant 0 : index
    %0 = memref.load %arg1[%c0] : memref<1xf32, #tpu.memory_space<smem>>
    %c0_0 = arith.constant 0 : index
    %c0_1 = arith.constant 0 : index
    %1 = vector.load %arg2[%c0_0, %c0_1] : memref<2x32xf32, #tpu.memory_space<vmem>>, vector<2x32xf32>
    %c0_2 = arith.constant 0 : index
    %c0_3 = arith.constant 0 : index
    %2 = vector.load %arg3[%c0_2, %c0_3] : memref<16x32xf32, #tpu.memory_space<vmem>>, vector<16x32xf32>
    %cst = arith.constant dense<0.000000e+00> : vector<2x16xf32>
    %3 = tpu.matmul %1, %2, %cst {dimension_numbers = #tpu.dot_dimension_numbers<[1], [1], [0], [0], [0, 0, 1, 0], [], []>} : vector<2x32xf32>, vector<16x32xf32>, vector<2x16xf32> -> vector<2x16xf32>
    %4 = vector.shape_cast %1 : vector<2x32xf32> to vector<2x1x32xf32>
    %c0_4 = arith.constant 0 : index
    %c0_5 = arith.constant 0 : index
    %c0_6 = arith.constant 0 : index
    %5 = vector.load %arg5[%c0_4, %c0_5, %c0_6] : memref<2x16x32xf32, #tpu.memory_space<vmem>>, vector<2x16x32xf32>
    %6 = vector.broadcast %4 : vector<2x1x32xf32> to vector<2x16x32xf32>
    %7 = arith.mulf %6, %5 : vector<2x16x32xf32>
    %cst_7 = arith.constant dense<0.000000e+00> : vector<2x16xf32>
    %8 = vector.multi_reduction <add>, %7, %cst_7 [2] : vector<2x16x32xf32> to vector<2x16xf32>
    %c0_8 = arith.constant 0 : index
    %c0_9 = arith.constant 0 : index
    %9 = vector.load %arg4[%c0_8, %c0_9] : memref<1x16xf32, #tpu.memory_space<vmem>>, vector<1x16xf32>
    %c0_10 = arith.constant 0 : index
    %c0_11 = arith.constant 0 : index
    %10 = vector.load %arg6[%c0_10, %c0_11] : memref<2x16xf32, #tpu.memory_space<vmem>>, vector<2x16xf32>
    %11 = vector.broadcast %0 : f32 to vector<2x16xf32>
    %12 = arith.mulf %11, %10 : vector<2x16xf32>
    %13 = vector.broadcast %9 : vector<1x16xf32> to vector<2x16xf32>
    %14 = arith.addf %13, %12 : vector<2x16xf32>
    %15 = vector.broadcast %0 : f32 to vector<2x16xf32>
    %16 = arith.mulf %15, %8 : vector<2x16xf32>
    %17 = arith.addf %3, %16 : vector<2x16xf32>
    %18 = arith.addf %17, %14 : vector<2x16xf32>
    %c0_12 = arith.constant 0 : index
    %c0_13 = arith.constant 0 : index
    %19 = vector.load %arg7[%c0_12, %c0_13] : memref<2x16xf32, #tpu.memory_space<vmem>>, vector<2x16xf32>
    tpu.vector_store %arg7[%c0_12, %c0_13], %18 {strides = array<i32>} : memref<2x16xf32, #tpu.memory_space<vmem>>, vector<2x16xf32>,
    return
  }
  func.func @transform_0(%arg0: i32) -> i32 {
    %c0_i32 = arith.constant 0 : i32
    %c0_i32_0 = arith.constant 0 : i32
    return %c0_i32 : i32
  }
  func.func @transform_1(%arg0: i32) -> (i32, i32) {
    %c0_i32 = arith.constant 0 : i32
    %c0_i32_0 = arith.constant 0 : i32
    return %arg0, %c0_i32 : i32, i32
  }
  func.func @transform_2(%arg0: i32) -> (i32, i32) {
    %c0_i32 = arith.constant 0 : i32
    %c0_i32_0 = arith.constant 0 : i32
    %c0_i32_1 = arith.constant 0 : i32
    return %c0_i32, %c0_i32_0 : i32, i32
  }
  func.func @transform_3(%arg0: i32) -> (i32, i32) {
    %c0_i32 = arith.constant 0 : i32
    %c0_i32_0 = arith.constant 0 : i32
    %c0_i32_1 = arith.constant 0 : i32
    return %c0_i32, %c0_i32_0 : i32, i32
  }
  func.func @transform_4(%arg0: i32) -> (i32, i32, i32) {
    %c0_i32 = arith.constant 0 : i32
    %c0_i32_0 = arith.constant 0 : i32
    %c0_i32_1 = arith.constant 0 : i32
    return %arg0, %c0_i32, %c0_i32_0 : i32, i32, i32
  }
  func.func @transform_5(%arg0: i32) -> (i32, i32) {
    %c0_i32 = arith.constant 0 : i32
    %c0_i32_0 = arith.constant 0 : i32
    return %arg0, %c0_i32 : i32, i32
  }
  func.func @transform_6(%arg0: i32) -> (i32, i32) {
    %c0_i32 = arith.constant 0 : i32
    %c0_i32_0 = arith.constant 0 : i32
    return %arg0, %c0_i32 : i32, i32
  }
}

</mosaic_0001>

<llo_original>
// kernel: tpu_custom_call.1
$region0: #{tpu_custom_call.1}
  #allocation0 [shape = 'u32[]', space=smem, size = 0x4, offset = 0x4, fixed_abs, tag = 'smem constant byte address 0x4 - core index']
  #allocation1 [shape = 'u32[144,128]{1,0:T(1,128)}', space=vmem, size = 0x12000, scoped, tag = 'internal scratch']
  #allocation2 [shape = 'f32[1]{0:T(128)S(6)}', space=smem, size = 0x200, scoped, tag = 'scoped memory for tpu_custom_call.1']
  %s0 = inlined_call_operand.<no memory space> [shape: f32[1], index: 0, kind: input, shape index: {}]
  %s1 = inlined_call_operand.vmem [shape: f32[2,32], index: 1, kind: input, shape index: {}]
  %s2 = inlined_call_operand.hbm [shape: f32[16,32], index: 2, kind: input, shape index: {}]
  %s3 = inlined_call_operand.vmem [shape: f32[1,16], index: 3, kind: input, shape index: {}]
  %s4 = inlined_call_operand.hbm [shape: f32[2,16,32], index: 4, kind: input, shape index: {}]
  %s5 = inlined_call_operand.vmem [shape: f32[2,16], index: 5, kind: input, shape index: {}]
  %s6 = inlined_call_operand.hbm [shape: f32[2,16], index: 6, kind: output, shape index: {}]
  %s7 = sld [smem:[#allocation0]]
  $region42: #{tpu_custom_call.1} parent=0
    _
  %s9 = ssub.s32 1, %s7
  %s10 = scalar_select 0, %s9, %s7
  %11 = sst [smem:[#allocation2]] %s0
  $region1: #{tpu_custom_call.1} parent=0
    #allocation3 [shape = 'u8[8192]{0}', space=vmem, size = 0x2000, scoped, tag = 'input window, operand 2, single buffered']
    #allocation4 [shape = 's32[1]{0}', space=sflag, size = 0x4, scoped, tag = 'scoped memory for tpu_custom_call.1']
    #allocation5 [shape = 's32[1]{0}', space=sflag, size = 0x4, scoped, tag = 'scoped memory for tpu_custom_call.1']
    #allocation6 [shape = 'u8[16384]{0}', space=vmem, size = 0x4000, scoped, tag = 'input window, operand 4, single buffered']
    #allocation7 [shape = 's32[1]{0}', space=sflag, size = 0x4, scoped, tag = 'scoped memory for tpu_custom_call.1']
    #allocation8 [shape = 'u8[1024]{0}', space=vmem, size = 0x400, scoped, tag = 'output window, operand 0, single buffered']
    %12 = vsyncpa [#allocation4], 0
    %13 = vsyncpa [#allocation7], 0
    %14 = vsyncpa [#allocation5], 0
    // Predicated region
    $region2: #{tpu_custom_call.1} parent=1 // pred_check
      _
    $region3: #{tpu_custom_call.1} parent=1 // pred_check_branch
      %16 = sbr.rel (0) target = $region5
    $region4: #{tpu_custom_call.1} parent=1 // pred_region
      _
    $region5: #{tpu_custom_call.1} parent=1 // pred_fallthru
      _
    // Predicated region
    $region6: #{tpu_custom_call.1} parent=1 // pred_check
      _
    $region7: #{tpu_custom_call.1} parent=1 // pred_check_branch
      %18 = sbr.rel (0) target = $region9
    $region8: #{tpu_custom_call.1} parent=1 // pred_region
      _
    $region9: #{tpu_custom_call.1} parent=1 // pred_fallthru
      _
    // Predicated region
    $region10: #{tpu_custom_call.1} parent=1 // pred_check
      _
    $region11: #{tpu_custom_call.1} parent=1 // pred_check_branch
      %20 = sbr.rel (0) target = $region13
    $region12: #{tpu_custom_call.1} parent=1 // pred_region
      %s22 = ssub.s32 256, 256
      %23 = vsyncadd [#allocation4], %s22
      %s24 = sshll.u32 [#allocation3], 4
      %s25 = int_to_ptr.vmem [resolvable:$true] %s24
      %30 = dma.hbm_to_vmem [thread:$0]  %s2, 256, %s25, [#allocation4], 128, 128, 8
    $region13: #{tpu_custom_call.1} parent=1 // pred_fallthru
      _
    // Predicated region
    $region14: #{tpu_custom_call.1} parent=1 // pred_check
      _
    $region15: #{tpu_custom_call.1} parent=1 // pred_check_branch
      %32 = sbr.rel (0) target = $region17
    $region16: #{tpu_custom_call.1} parent=1 // pred_region
      _
    $region17: #{tpu_custom_call.1} parent=1 // pred_fallthru
      _
    // Predicated region
    $region18: #{tpu_custom_call.1} parent=1 // pred_check
      _
    $region19: #{tpu_custom_call.1} parent=1 // pred_check_branch
      %34 = sbr.rel (0) target = $region21
    $region20: #{tpu_custom_call.1} parent=1 // pred_region
      %s36 = ssub.s32 512, 512
      %37 = vsyncadd [#allocation7], %s36
      %s38 = sshll.u32 [#allocation6], 4
      %s39 = int_to_ptr.vmem [resolvable:$true] %s38
      %44 = dma.hbm_to_vmem [thread:$0]  %s4, 512, %s39, [#allocation7], 128, 128, 8
    $region21: #{tpu_custom_call.1} parent=1 // pred_fallthru
      _
    // Predicated region
    $region22: #{tpu_custom_call.1} parent=1 // pred_check
      _
    $region23: #{tpu_custom_call.1} parent=1 // pred_check_branch
      %46 = sbr.rel (0) target = $region25
    $region24: #{tpu_custom_call.1} parent=1 // pred_region
      _
    $region25: #{tpu_custom_call.1} parent=1 // pred_fallthru
      _
    // Predicated region
    $region26: #{tpu_custom_call.1} parent=1 // pred_check
      _
    $region27: #{tpu_custom_call.1} parent=1 // pred_check_branch
      %48 = sbr.rel (0) target = $region29
    $region28: #{tpu_custom_call.1} parent=1 // pred_region
      %49 = dma.done [#allocation4], 256
    $region29: #{tpu_custom_call.1} parent=1 // pred_fallthru
      _
    // Predicated region
    $region30: #{tpu_custom_call.1} parent=1 // pred_check
      _
    $region31: #{tpu_custom_call.1} parent=1 // pred_check_branch
      %51 = sbr.rel (0) target = $region33
    $region32: #{tpu_custom_call.1} parent=1 // pred_region
      %52 = dma.done [#allocation7], 512
    $region33: #{tpu_custom_call.1} parent=1 // pred_fallthru
      _
    %s53 = sld [smem:[#allocation2]]
    %v54 = vld [vmem:[%s1] sm:$0x3]
    %v55 = vld [vmem:[#allocation3] sm:$0xff]
    %v56 = vld [vmem:[#allocation3 + $0x8] sm:$0xff]
    %v59 = vunpack.c.l.s4 1966171168
    %v60 = vunpack.c.0.s8 %v59
    %v61 = vlaneseq
    %v62 = vshrl.u32 %v61, 7
    %v63 = vsub.s32 %v60, %v62
    %v64 = vrot.slane %v54, %v63
    %v65 = vcombine.high %v64, %v64
    %v67 = vunpack.c.l.s4 1966171168
    %v68 = vunpack.c.0.s8 %v67
    %v69 = vlaneseq
    %v70 = vshrl.u32 %v69, 7
    %v71 = vsub.s32 %v68, %v70
    %v72 = vrot.slane %v64, %v71
    %v74 = vunpack.c.l.s4 1966171168
    %v75 = vunpack.c.0.s8 %v74
    %v76 = vlaneseq
    %v77 = vshrl.u32 %v76, 7
    %v78 = vsub.s32 %v75, %v77
    %v79 = vrot.slane %v65, %v78
    %v80 = vld [vmem:[#allocation6] sm:$0xff]
    %v81 = vld [vmem:[#allocation6 + $0x8] sm:$0xff]
    %v82 = vld [vmem:[#allocation6 + $0x10] sm:$0xff]
    %v83 = vld [vmem:[#allocation6 + $0x18] sm:$0xff]
    %v84 = vlaneseq
    %v85 = vshrl.u32 %v84, 7
    %v86 = vsub.s32 0, %v85
    %v87 = vrot.slane %v72, %v86
    %v88 = vlaneseq
    %v89 = vshrl.u32 %v88, 7
    %v90 = vsub.s32 0, %v89
    %v91 = vrot.slane %v79, %v90
    %v94 = vmul.f32 %v87, %v80
    %v95 = vmul.f32 %v87, %v81
    %v96 = vmul.f32 %v91, %v82
    %v97 = vmul.f32 %v91, %v83
    %vm98 = vcmask 261120
    %v99 = vsel %vm98, %v94, 0.0
    %100 = vadd.xlane.f32.xlu0 %v99
    %v101 = vpop.xlane.xlu0 %100
    %v102 = vsel %vm98, %v95, 0.0
    %103 = vadd.xlane.f32.xlu0 %v102
    %v104 = vpop.xlane.xlu0 %103
    %v105 = vsel %vm98, %v96, 0.0
    %106 = vadd.xlane.f32.xlu0 %v105
    %v107 = vpop.xlane.xlu0 %106
    %v108 = vsel %vm98, %v97, 0.0
    %109 = vadd.xlane.f32.xlu0 %v108
    %v110 = vpop.xlane.xlu0 %109
    %v111 = vld [vmem:[%s3] sm:$0x1]
    %v112 = vld [vmem:[%s5] sm:$0x3]
    %v113 = vstv %s53
    %v114 = vmul.f32 %v113, %v112
    %v116 = vlaneseq
    %v117 = vshrl.u32 %v116, 7
    %v118 = vsub.s32 0, %v117
    %v119 = vrot.slane %v111, %v118
    %v121 = vadd.f32 %v119, %v114
    %v122 = vmul.f32 %v113, %v101
    %v123 = vmul.f32 %v113, %v104
    %v124 = vmul.f32 %v113, %v107
    %v125 = vmul.f32 %v113, %v110
    %v130 = vlaneseq
    %v131 = vand.u32 %v130, 127
    %v132 = vlaneseq
    %v133 = vshrl.u32 %v132, 7
    %v134 = vsub.s32 %v131, %v133
    %v135 = vrot.slane %v122, %v134
    %v136 = vadd.s32 %v131, 4294967288
    %v137 = vlaneseq
    %v138 = vshrl.u32 %v137, 7
    %v139 = vsub.s32 %v136, %v138
    %v140 = vrot.slane %v123, %v139
    %vm141 = vcmask 130112
    %v142 = vsel %vm141, %v140, %v135
    %v143 = vlaneseq
    %v144 = vshrl.u32 %v143, 7
    %v145 = vsub.s32 %v131, %v144
    %v146 = vrot.slane %v124, %v145
    %v147 = vlaneseq
    %v148 = vshrl.u32 %v147, 7
    %v149 = vsub.s32 %v136, %v148
    %v150 = vrot.slane %v125, %v149
    %v151 = vsel %vm141, %v150, %v146
    %vm152 = vcmask 1041409
    %v153 = vsel %vm152, %v151, %v142
    %v155 = vsel %vm98, %v54, 0
    %v158 = vsel %vm98, %v55, 0
    %v161 = vsel %vm98, %v56, 0
    %163 = vmatprep.subr.mxu0 0.0
    %164 = vmatpush1.xpose.msra.mxu0 %v158
    %165 = vmatprep.subr.mxu0 0.0
    %166 = vmatpush1.xpose.msra.mxu0 %v161
    %167 = vmatprep.subr.mxu0 0.0
    %168 = vmatpush1.xpose.msra.mxu0 0.0
    %169 = vmatprep.subr.mxu0 0.0
    %170 = vmatpush1.xpose.msra.mxu0 0.0
    %171 = vmatprep.subr.mxu0 0.0
    %172 = vmatpush1.xpose.msra.mxu0 0.0
    %173 = vmatprep.subr.mxu0 0.0
    %174 = vmatpush1.xpose.msra.mxu0 0.0
    %175 = vmatprep.subr.mxu0 0.0
    %176 = vmatpush1.xpose.msra.mxu0 0.0
    %177 = vmatprep.subr.mxu0 0.0
    %178 = vmatpush1.xpose.msra.mxu0 0.0
    %179 = vmatprep.subr.mxu0 0.0
    %180 = vmatpush1.xpose.msra.mxu0 0.0
    %181 = vmatprep.subr.mxu0 0.0
    %182 = vmatpush1.xpose.msra.mxu0 0.0
    %183 = vmatprep.subr.mxu0 0.0
    %184 = vmatpush1.xpose.msra.mxu0 0.0
    %185 = vmatprep.subr.mxu0 0.0
    %186 = vmatpush1.xpose.msra.mxu0 0.0
    %187 = vmatprep.subr.mxu0 0.0
    %188 = vmatpush1.xpose.msra.mxu0 0.0
    %189 = vmatprep.subr.mxu0 0.0
    %190 = vmatpush1.xpose.msra.mxu0 0.0
    %191 = vmatprep.subr.mxu0 0.0
    %192 = vmatpush1.xpose.msra.mxu0 0.0
    %193 = vmatprep.subr.mxu0 0.0
    %194 = vmatpush1.xpose.msra.mxu0 0.0
    %195 = vmatprep.subr.mxu0 0.0
    %196 = vmatpush1.xpose.msra.mxu0 0.0
    %197 = vmatprep.subr.mxu0 0.0
    %198 = vmatpush1.xpose.msra.mxu0 0.0
    %199 = vmatprep.subr.mxu0 0.0
    %200 = vmatpush1.xpose.msra.mxu0 0.0
    %201 = vmatprep.subr.mxu0 0.0
    %202 = vmatpush1.xpose.msra.mxu0 0.0
    %203 = vmatprep.subr.mxu0 0.0
    %204 = vmatpush1.xpose.msra.mxu0 0.0
    %205 = vmatprep.subr.mxu0 0.0
    %206 = vmatpush1.xpose.msra.mxu0 0.0
    %207 = vmatprep.subr.mxu0 0.0
    %208 = vmatpush1.xpose.msra.mxu0 0.0
    %209 = vmatprep.subr.mxu0 0.0
    %210 = vmatpush1.xpose.msra.mxu0 0.0
    %211 = vmatprep.subr.mxu0 0.0
    %212 = vmatpush1.xpose.msra.mxu0 0.0
    %213 = vmatprep.subr.mxu0 0.0
    %214 = vmatpush1.xpose.msra.mxu0 0.0
    %215 = vmatprep.subr.mxu0 0.0
    %216 = vmatpush1.xpose.msra.mxu0 0.0
    %217 = vmatprep.subr.mxu0 0.0
    %218 = vmatpush1.xpose.msra.mxu0 0.0
    %219 = vmatprep.subr.mxu0 0.0
    %220 = vmatpush1.xpose.msra.mxu0 0.0
    %221 = vmatprep.subr.mxu0 0.0
    %222 = vmatpush1.xpose.msra.mxu0 0.0
    %223 = vmatprep.subr.mxu0 0.0
    %224 = vmatpush1.xpose.msra.mxu0 0.0
    %225 = vmatprep.subr.mxu0 0.0
    %226 = vmatpush1.xpose.msra.mxu0 0.0
    %227 = vmatprep.mubr.f32.mxu0 0.0
    %228 = vmatmul.mubr.f32.gmra.mrb[0].mxu0 %v155
    %v229 = vpop.f32.mrb[0].mxu0
    %v230 = vadd.f32 %v153, %v229
    %v231 = vpop.f32.mrb[0].mxu0
    %232 = vdwg.mxu0
    %v233 = vadd.f32 %v230, %v121
    %vm234 = vcmask 123904
    %235 = vst.msk [vmem:[#allocation8] sm:$0x3] %vm234, %v233
    // Predicated region
    $region34: #{tpu_custom_call.1} parent=1 // pred_check
      _
    $region35: #{tpu_custom_call.1} parent=1 // pred_check_branch
      %237 = sbr.rel (0) target = $region37
    $region36: #{tpu_custom_call.1} parent=1 // pred_region
      %s239 = ssub.s32 32, 32
      %240 = vsyncadd [#allocation5], %s239
      %s242 = sshll.u32 [#allocation8], 4
      %s243 = int_to_ptr.vmem [resolvable:$true] %s242
      %245 = dma.vmem_to_hbm [thread:$0]  %s243, 32, %s6, [#allocation5]
    $region37: #{tpu_custom_call.1} parent=1 // pred_fallthru
      _
    // Predicated region
    $region38: #{tpu_custom_call.1} parent=1 // pred_check
      _
    $region39: #{tpu_custom_call.1} parent=1 // pred_check_branch
      %247 = sbr.rel (0) target = $region41
    $region40: #{tpu_custom_call.1} parent=1 // pred_region
      %248 = dma.done [#allocation5], 32
    $region41: #{tpu_custom_call.1} parent=1 // pred_fallthru
      _
    %249 = vsyncpa [#allocation4], 1
    %250 = vsyncpa [#allocation7], 1
    %251 = vsyncpa [#allocation5], 1

</llo_original>
